<compile_context>
chip_gen: v7x
topology: tpu7x:2x2x1
jax: 0.10.0
libtpu: 0.0.40
codegen_flags: <defaults>
</compile_context>

<pallas_src>
import functools

import jax
import jax.numpy as jnp
from jax.experimental import pallas as pl
from jax.experimental.pallas import tpu as pltpu


def _modality_coder_kernel(x_ref, w1_ref, b1_ref, w2_ref, b2_ref, o_ref):
    # fc1: bf16 MXU matmul, f32 accumulate, f32 bias + ReLU (VPU).
    h = jnp.dot(x_ref[...], w1_ref[...], preferred_element_type=jnp.float32)
    h = jnp.maximum(h + b1_ref[...], 0.0)
    # fc2: feed h back through the MXU in bf16; accumulate in f32 again.
    y = jnp.dot(h.astype(w2_ref.dtype), w2_ref[...],
                preferred_element_type=jnp.float32)
    y = jnp.maximum(y + b2_ref[...], 0.0)
    o_ref[...] = y.astype(o_ref.dtype)


def _round_up(v, m):
    return (v + m - 1) // m * m


@functools.partial(jax.jit, static_argnames=("block_m",))
def modality_coder(x, w1, b1, w2, b2, *, block_m=256):
    """Fused relu(fc2(relu(fc1(x)))).

    x:  [N, D_in]            (output matches x.dtype)
    w1: [L, D_in], b1: [L]   (torch nn.Linear layout)
    w2: [L, L],    b2: [L]
    """
    n, d_in = x.shape
    latent = w1.shape[0]
    out_dtype = x.dtype

    # Lane-dense feature dims (multiples of 128).
    d_pad = _round_up(d_in, 128)
    l_pad = _round_up(latent, 128)

    # Row tile: multiple of 16 (bf16 sublane packing).
    bm = _round_up(max(16, min(block_m, _round_up(n, 16))), 16)
    # Keep >= 2 grid steps when possible so v7x's second TensorCore gets work.
    if _round_up(n, bm) // bm < 2 and n > 16:
        bm = _round_up(pl.cdiv(n, 2), 16)

    # VMEM budget: x/out tiles are double-buffered, weights/biases resident.
    # Stay under 12 MiB so the default scoped VMEM limit works on every chip.
    def vmem_bytes(m):
        return (2 * m * d_pad * 2                    # x tile (bf16), 2 bufs
                + 2 * m * l_pad * 4                  # out tile (f32), 2 bufs
                + (d_pad * l_pad + l_pad * l_pad) * 2  # resident bf16 weights
                + 2 * l_pad * 4)                     # resident f32 biases
    while bm > 16 and vmem_bytes(bm) > 12 * 1024 * 1024:
        bm = _round_up(bm // 2, 16)

    n_pad = _round_up(n, bm)

    # Zero-pad to tiled / lane-dense shapes and cast matmul operands to bf16.
    x_p = jnp.zeros((n_pad, d_pad), jnp.bfloat16).at[:n, :d_in].set(
        x.astype(jnp.bfloat16))
    w1_p = jnp.zeros((d_pad, l_pad), jnp.bfloat16).at[:d_in, :latent].set(
        w1.T.astype(jnp.bfloat16))
    w2_p = jnp.zeros((l_pad, l_pad), jnp.bfloat16).at[:latent, :latent].set(
        w2.T.astype(jnp.bfloat16))
    b1_p = jnp.zeros((1, l_pad), jnp.float32).at[0, :latent].set(
        b1.astype(jnp.float32))
    b2_p = jnp.zeros((1, l_pad), jnp.float32).at[0, :latent].set(
        b2.astype(jnp.float32))

    grid = (n_pad // bm,)
    out = pl.pallas_call(
        _modality_coder_kernel,
        out_shape=jax.ShapeDtypeStruct((n_pad, l_pad), out_dtype),
        grid_spec=pltpu.PrefetchScalarGridSpec(
            num_scalar_prefetch=0,
            grid=grid,
            in_specs=[
                # Streaming row tile of x.
                pl.BlockSpec((bm, d_pad), lambda i: (i, 0)),
                # Weights / biases: constant index_map -> resident in VMEM.
                pl.BlockSpec((d_pad, l_pad), lambda i: (0, 0)),
                pl.BlockSpec((1, l_pad), lambda i: (0, 0)),
                pl.BlockSpec((l_pad, l_pad), lambda i: (0, 0)),
                pl.BlockSpec((1, l_pad), lambda i: (0, 0)),
            ],
            out_specs=pl.BlockSpec((bm, l_pad), lambda i: (i, 0)),
        ),
        compiler_params=pltpu.CompilerParams(
            dimension_semantics=("parallel",)),
    )(x_p, w1_p, b1_p, w2_p, b2_p)

    # Strip row / feature padding.
    return out[:n, :latent]


def _torch_linear_init(key, fan_in, fan_out):
    """Mimics torch.nn.Linear default init: U[-1/sqrt(fan_in), 1/sqrt(fan_in)]."""
    k_w, k_b = jax.random.split(key)
    bound = 1.0 / jnp.sqrt(jnp.float32(fan_in))
    w = jax.random.uniform(k_w, (fan_out, fan_in), jnp.float32, -bound, bound)
    b = jax.random.uniform(k_b, (fan_out,), jnp.float32, -bound, bound)
    return w, b


def reference_forward(x, w1, b1, w2, b2):
    h = jnp.maximum(x @ w1.T + b1, 0.0)
    return jnp.maximum(h @ w2.T + b2, 0.0)


if __name__ == "__main__":
    # Deliberately "awkward" small shapes: N not a multiple of the row tile,
    # feature dims not multiples of 128 -> exercises the padding path while
    # the kernel itself still runs lane-dense 256-wide tiles on 2 grid steps.
    batch, input_dim, latent_dim = 500, 200, 160

    key = jax.random.PRNGKey(0)
    k_x, k_fc1, k_fc2 = jax.random.split(key, 3)

    x = jax.random.normal(k_x, (batch, input_dim), jnp.float32)
    w1, b1 = _torch_linear_init(k_fc1, input_dim, latent_dim)   # [L, D_in], [L]
    w2, b2 = _torch_linear_init(k_fc2, latent_dim, latent_dim)  # [L, L],    [L]

    out = modality_coder(x, w1, b1, w2, b2, block_m=256)
    out = jax.block_until_ready(out)

    ref = reference_forward(x, w1, b1, w2, b2)
    assert out.shape == (batch, latent_dim)
    # bf16 matmul operands with f32 accumulation -> loosened tolerance.
    max_err = float(jnp.max(jnp.abs(out - ref)))
    assert jnp.allclose(out, ref, atol=3e-2, rtol=3e-2), f"max_err={max_err}"

    print("KERNEL_OK")
</pallas_src>

<mosaic_0001>
module attributes {stable_mosaic.version = 11 : i64} {
  func.func @_modality_coder_kernel(%arg0: i32, %arg1: memref<256x256xbf16, #tpu.memory_space<vmem>>, %arg2: memref<256x256xbf16, #tpu.memory_space<vmem>>, %arg3: memref<1x256xf32, #tpu.memory_space<vmem>>, %arg4: memref<256x256xbf16, #tpu.memory_space<vmem>>, %arg5: memref<1x256xf32, #tpu.memory_space<vmem>>, %arg6: memref<256x256xf32, #tpu.memory_space<vmem>>) attributes {dimension_semantics = [#tpu.dimension_semantics<parallel>], iteration_bounds = array<i64: 2>, scalar_prefetch = 0 : i64, scratch_operands = 0 : i64, tpu.core_type = #tpu.core_type<tc>, window_params = [{transform_indices = @transform_0, window_bounds = array<i64: 256, 256>}, {pipeline_mode = #tpu.pipeline_mode<synchronous>, transform_indices = @transform_1, window_bounds = array<i64: 256, 256>}, {pipeline_mode = #tpu.pipeline_mode<synchronous>, transform_indices = @transform_2, window_bounds = array<i64: 1, 256>}, {pipeline_mode = #tpu.pipeline_mode<synchronous>, transform_indices = @transform_3, window_bounds = array<i64: 256, 256>}, {pipeline_mode = #tpu.pipeline_mode<synchronous>, transform_indices = @transform_4, window_bounds = array<i64: 1, 256>}, {transform_indices = @transform_5, window_bounds = array<i64: 256, 256>}]} {
    %c0 = arith.constant 0 : index
    %c0_0 = arith.constant 0 : index
    %0 = vector.load %arg1[%c0, %c0_0] : memref<256x256xbf16, #tpu.memory_space<vmem>>, vector<256x256xbf16>
    %c0_1 = arith.constant 0 : index
    %c0_2 = arith.constant 0 : index
    %1 = vector.load %arg2[%c0_1, %c0_2] : memref<256x256xbf16, #tpu.memory_space<vmem>>, vector<256x256xbf16>
    %cst = arith.constant dense<0.000000e+00> : vector<256x256xf32>
    %2 = tpu.matmul %0, %1, %cst {dimension_numbers = #tpu.dot_dimension_numbers<[1], [0], [0], [1], [0, 0, 1, 1], [], []>} : vector<256x256xbf16>, vector<256x256xbf16>, vector<256x256xf32> -> vector<256x256xf32>
    %c0_3 = arith.constant 0 : index
    %c0_4 = arith.constant 0 : index
    %3 = vector.load %arg3[%c0_3, %c0_4] : memref<1x256xf32, #tpu.memory_space<vmem>>, vector<1x256xf32>
    %4 = vector.broadcast %3 : vector<1x256xf32> to vector<256x256xf32>
    %5 = arith.addf %2, %4 : vector<256x256xf32>
    %cst_5 = arith.constant 0.000000e+00 : f32
    %6 = vector.broadcast %cst_5 : f32 to vector<256x256xf32>
    %7 = arith.maximumf %5, %6 : vector<256x256xf32>
    %8 = arith.truncf %7 : vector<256x256xf32> to vector<256x256xbf16>
    %c0_6 = arith.constant 0 : index
    %c0_7 = arith.constant 0 : index
    %9 = vector.load %arg4[%c0_6, %c0_7] : memref<256x256xbf16, #tpu.memory_space<vmem>>, vector<256x256xbf16>
    %cst_8 = arith.constant dense<0.000000e+00> : vector<256x256xf32>
    %10 = tpu.matmul %8, %9, %cst_8 {dimension_numbers = #tpu.dot_dimension_numbers<[1], [0], [0], [1], [0, 0, 1, 1], [], []>} : vector<256x256xbf16>, vector<256x256xbf16>, vector<256x256xf32> -> vector<256x256xf32>
    %c0_9 = arith.constant 0 : index
    %c0_10 = arith.constant 0 : index
    %11 = vector.load %arg5[%c0_9, %c0_10] : memref<1x256xf32, #tpu.memory_space<vmem>>, vector<1x256xf32>
    %12 = vector.broadcast %11 : vector<1x256xf32> to vector<256x256xf32>
    %13 = arith.addf %10, %12 : vector<256x256xf32>
    %cst_11 = arith.constant 0.000000e+00 : f32
    %14 = vector.broadcast %cst_11 : f32 to vector<256x256xf32>
    %15 = arith.maximumf %13, %14 : vector<256x256xf32>
    %c0_12 = arith.constant 0 : index
    %c0_13 = arith.constant 0 : index
    %16 = vector.load %arg6[%c0_12, %c0_13] : memref<256x256xf32, #tpu.memory_space<vmem>>, vector<256x256xf32>
    tpu.vector_store %arg6[%c0_12, %c0_13], %15 {strides = array<i32>} : memref<256x256xf32, #tpu.memory_space<vmem>>, vector<256x256xf32>,
    return
  }
  func.func @transform_0(%arg0: i32) -> (i32, i32) {
    %c0_i32 = arith.constant 0 : i32
    %c0_i32_0 = arith.constant 0 : i32
    return %arg0, %c0_i32 : i32, i32
  }
  func.func @transform_1(%arg0: i32) -> (i32, i32) {
    %c0_i32 = arith.constant 0 : i32
    %c0_i32_0 = arith.constant 0 : i32
    %c0_i32_1 = arith.constant 0 : i32
    return %c0_i32, %c0_i32_0 : i32, i32
  }
  func.func @transform_2(%arg0: i32) -> (i32, i32) {
    %c0_i32 = arith.constant 0 : i32
    %c0_i32_0 = arith.constant 0 : i32
    %c0_i32_1 = arith.constant 0 : i32
    return %c0_i32, %c0_i32_0 : i32, i32
  }
  func.func @transform_3(%arg0: i32) -> (i32, i32) {
    %c0_i32 = arith.constant 0 : i32
    %c0_i32_0 = arith.constant 0 : i32
    %c0_i32_1 = arith.constant 0 : i32
    return %c0_i32, %c0_i32_0 : i32, i32
  }
  func.func @transform_4(%arg0: i32) -> (i32, i32) {
    %c0_i32 = arith.constant 0 : i32
    %c0_i32_0 = arith.constant 0 : i32
    %c0_i32_1 = arith.constant 0 : i32
    return %c0_i32, %c0_i32_0 : i32, i32
  }
  func.func @transform_5(%arg0: i32) -> (i32, i32) {
    %c0_i32 = arith.constant 0 : i32
    %c0_i32_0 = arith.constant 0 : i32
    return %arg0, %c0_i32 : i32, i32
  }
}

</mosaic_0001>

<llo_original>
// kernel: modality_coder.1
$region0: #{modality_coder.1}
  #allocation0 [shape = 'u32[]', space=smem, size = 0x4, offset = 0x4, fixed_abs, tag = 'smem constant byte address 0x4 - core index']
  #allocation1 [shape = 'u32[144,128]{1,0:T(1,128)}', space=vmem, size = 0x12000, scoped, tag = 'internal scratch']
  %s0 = inlined_call_operand.vmem [shape: bf16[512,256], index: 0, kind: input, shape index: {}]
  %s1 = inlined_call_operand.vmem [shape: bf16[256,256], index: 1, kind: input, shape index: {}]
  %s2 = inlined_call_operand.vmem [shape: f32[1,256], index: 2, kind: input, shape index: {}]
  %s3 = inlined_call_operand.vmem [shape: bf16[256,256], index: 3, kind: input, shape index: {}]
  %s4 = inlined_call_operand.vmem [shape: f32[1,256], index: 4, kind: input, shape index: {}]
  %s5 = inlined_call_operand.vmem [shape: f32[512,256], index: 5, kind: output, shape index: {}]
  %s6 = sld [smem:[#allocation0]]
  $region53: #{modality_coder.1} parent=0
    _
  %s8 = ssub.s32 1, %s6
  %s9 = scalar_select 0, %s8, %s6
  loop: start=0, step=1, limit=4
  $region2: #{modality_coder.1} parent=0 // loop_pre_header
    _
  $region3: #{modality_coder.1} parent=0 // loop_header
    %s11 = sphi 0, %s15
    %p12 = scmp.ge.s32.totalorder %s11, 4
    %s21 = sphi 0, %s23
    %s24 = sphi 0, %s21
    %s25 = sphi 0, %s24
    %s41 = sphi 0, %s25
    %s45 = sphi 0, %s45
    %s47 = sphi 0, %s45
    %s48 = sphi 0, %s47
    %s62 = sphi 0, %s48
    %s66 = sphi 0, %s66
    %s68 = sphi 0, %s66
    %s69 = sphi 0, %s68
    %s83 = sphi 0, %s69
    %s87 = sphi 0, %s87
    %s89 = sphi 0, %s87
    %s90 = sphi 0, %s89
    %s104 = sphi 0, %s90
    %s108 = sphi 0, %s108
    %s110 = sphi 0, %s108
    %s111 = sphi 0, %s110
    %s125 = sphi 0, %s111
    %s131 = sphi 0, %s133
    %s134 = sphi 0, %s131
    %s135 = sphi 0, %s134
    %s151 = sphi 0, %s135
  $region4: #{modality_coder.1} parent=0 // loop_header_branch
    %14 = sbr.rel (%p12) target = $region8
  $region5: #{modality_coder.1} parent=0 // loop_body
    %s16 = ssub.s32 %s11, 1
    %s17 = ssub.s32 %s11, 2
    %s18 = sadd.s32 %s11, 1
    %s19 = ssub.s32 %s11, %s18
    %p20 = scmp.eq.s32.totalorder %s19, 0
    %s22 = sadd.s32 %s21, 1
    %s23 = scalar_select %p20, %s21, %s22
    %p26 = pneg %p20
    %p27 = scmp.eq.s32.totalorder %s11, 1
    %p28 = por %p26, %p27
    %p29 = scmp.ne.s32.totalorder %s21, %s24
    %p30 = scmp.eq.s32.totalorder %s11, 0
    %p31 = por %p29, %p30
    %p32 = scmp.ne.s32.totalorder %s21, %s24
    %p33 = scmp.eq.s32.totalorder %s16, 1
    %p34 = por %p32, %p33
    %p35 = scmp.ne.s32.totalorder %s24, %s25
    %p36 = scmp.eq.s32.totalorder %s16, 0
    %p37 = por %p35, %p36
    %p38 = scmp.ne.s32.totalorder %s24, %s25
    %p39 = scmp.eq.s32.totalorder %s17, 1
    %p40 = por %p38, %p39
    %p42 = scmp.ne.s32.totalorder %s25, %s41
    %p43 = scmp.eq.s32.totalorder %s17, 0
    %p44 = por %p42, %p43
    %s46 = sadd.s32 %s45, 1
    %p49 = scmp.eq.s32.totalorder %s11, 1
    %p50 = scmp.ne.s32.totalorder %s45, %s47
    %p51 = scmp.eq.s32.totalorder %s11, 0
    %p52 = por %p50, %p51
    %p53 = scmp.ne.s32.totalorder %s45, %s47
    %p54 = scmp.eq.s32.totalorder %s16, 1
    %p55 = por %p53, %p54
    %p56 = scmp.ne.s32.totalorder %s47, %s48
    %p57 = scmp.eq.s32.totalorder %s16, 0
    %p58 = por %p56, %p57
    %p59 = scmp.ne.s32.totalorder %s47, %s48
    %p60 = scmp.eq.s32.totalorder %s17, 1
    %p61 = por %p59, %p60
    %p63 = scmp.ne.s32.totalorder %s48, %s62
    %p64 = scmp.eq.s32.totalorder %s17, 0
    %p65 = por %p63, %p64
    %s67 = sadd.s32 %s66, 1
    %p70 = scmp.eq.s32.totalorder %s11, 1
    %p71 = scmp.ne.s32.totalorder %s66, %s68
    %p72 = scmp.eq.s32.totalorder %s11, 0
    %p73 = por %p71, %p72
    %p74 = scmp.ne.s32.totalorder %s66, %s68
    %p75 = scmp.eq.s32.totalorder %s16, 1
    %p76 = por %p74, %p75
    %p77 = scmp.ne.s32.totalorder %s68, %s69
    %p78 = scmp.eq.s32.totalorder %s16, 0
    %p79 = por %p77, %p78
    %p80 = scmp.ne.s32.totalorder %s68, %s69
    %p81 = scmp.eq.s32.totalorder %s17, 1
    %p82 = por %p80, %p81
    %p84 = scmp.ne.s32.totalorder %s69, %s83
    %p85 = scmp.eq.s32.totalorder %s17, 0
    %p86 = por %p84, %p85
    %s88 = sadd.s32 %s87, 1
    %p91 = scmp.eq.s32.totalorder %s11, 1
    %p92 = scmp.ne.s32.totalorder %s87, %s89
    %p93 = scmp.eq.s32.totalorder %s11, 0
    %p94 = por %p92, %p93
    %p95 = scmp.ne.s32.totalorder %s87, %s89
    %p96 = scmp.eq.s32.totalorder %s16, 1
    %p97 = por %p95, %p96
    %p98 = scmp.ne.s32.totalorder %s89, %s90
    %p99 = scmp.eq.s32.totalorder %s16, 0
    %p100 = por %p98, %p99
    %p101 = scmp.ne.s32.totalorder %s89, %s90
    %p102 = scmp.eq.s32.totalorder %s17, 1
    %p103 = por %p101, %p102
    %p105 = scmp.ne.s32.totalorder %s90, %s104
    %p106 = scmp.eq.s32.totalorder %s17, 0
    %p107 = por %p105, %p106
    %s109 = sadd.s32 %s108, 1
    %p112 = scmp.eq.s32.totalorder %s11, 1
    %p113 = scmp.ne.s32.totalorder %s108, %s110
    %p114 = scmp.eq.s32.totalorder %s11, 0
    %p115 = por %p113, %p114
    %p116 = scmp.ne.s32.totalorder %s108, %s110
    %p117 = scmp.eq.s32.totalorder %s16, 1
    %p118 = por %p116, %p117
    %p119 = scmp.ne.s32.totalorder %s110, %s111
    %p120 = scmp.eq.s32.totalorder %s16, 0
    %p121 = por %p119, %p120
    %p122 = scmp.ne.s32.totalorder %s110, %s111
    %p123 = scmp.eq.s32.totalorder %s17, 1
    %p124 = por %p122, %p123
    %p126 = scmp.ne.s32.totalorder %s111, %s125
    %p127 = scmp.eq.s32.totalorder %s17, 0
    %p128 = por %p126, %p127
    %s129 = ssub.s32 %s11, %s18
    %p130 = scmp.eq.s32.totalorder %s129, 0
    %s132 = sadd.s32 %s131, 1
    %s133 = scalar_select %p130, %s131, %s132
    %p136 = pneg %p130
    %p137 = scmp.eq.s32.totalorder %s11, 1
    %p138 = por %p136, %p137
    %p139 = scmp.ne.s32.totalorder %s131, %s134
    %p140 = scmp.eq.s32.totalorder %s11, 0
    %p141 = por %p139, %p140
    %p142 = scmp.ne.s32.totalorder %s131, %s134
    %p143 = scmp.eq.s32.totalorder %s16, 1
    %p144 = por %p142, %p143
    %p145 = scmp.ne.s32.totalorder %s134, %s135
    %p146 = scmp.eq.s32.totalorder %s16, 0
    %p147 = por %p145, %p146
    %p148 = scmp.ne.s32.totalorder %s134, %s135
    %p149 = scmp.eq.s32.totalorder %s17, 1
    %p150 = por %p148, %p149
    %p152 = scmp.ne.s32.totalorder %s135, %s151
    %p153 = scmp.eq.s32.totalorder %s17, 0
    %p154 = por %p152, %p153
    %p155 = scmp.le.s32.totalorder 1, %s11
    %p156 = scmp.lt.s32.totalorder %s11, 3
    %p157 = pnand %p155, %p156
    %p158 = pneg %p157
    // Predicated region
    $region9: #{modality_coder.1} parent=5 // pred_check
      _
    $region10: #{modality_coder.1} parent=5 // pred_check_branch
      %160 = sbr.rel (%p157) target = $region12
    $region11: #{modality_coder.1} parent=5 // pred_region
      %s161 = ssub.s32 %s11, 1
      // Predicated region
      $region13: #{modality_coder.1} parent=11 // pred_check
        %p162 = pneg %p58
      $region14: #{modality_coder.1} parent=11 // pred_check_branch
        %164 = sbr.rel (%p162) target = $region16
      $region15: #{modality_coder.1} parent=11 // pred_region
        _
      $region16: #{modality_coder.1} parent=11 // pred_fallthru
        _
      // Predicated region
      $region17: #{modality_coder.1} parent=11 // pred_check
        %p165 = pneg %p79
      $region18: #{modality_coder.1} parent=11 // pred_check_branch
        %167 = sbr.rel (%p165) target = $region20
      $region19: #{modality_coder.1} parent=11 // pred_region
        _
      $region20: #{modality_coder.1} parent=11 // pred_fallthru
        _
      // Predicated region
      $region21: #{modality_coder.1} parent=11 // pred_check
        %p168 = pneg %p100
      $region22: #{modality_coder.1} parent=11 // pred_check_branch
        %170 = sbr.rel (%p168) target = $region24
      $region23: #{modality_coder.1} parent=11 // pred_region
        _
      $region24: #{modality_coder.1} parent=11 // pred_fallthru
        _
      // Predicated region
      $region25: #{modality_coder.1} parent=11 // pred_check
        %p171 = pneg %p121
      $region26: #{modality_coder.1} parent=11 // pred_check_branch
        %173 = sbr.rel (%p171) target = $region28
      $region27: #{modality_coder.1} parent=11 // pred_region
        _
      $region28: #{modality_coder.1} parent=11 // pred_fallthru
        _
    $region12: #{modality_coder.1} parent=5 // pred_fallthru
      _
    %p174 = scmp.lt.s32.totalorder %s11, 2
    // Predicated region
    $region29: #{modality_coder.1} parent=5 // pred_check
      %p175 = pneg %p174
    $region30: #{modality_coder.1} parent=5 // pred_check_branch
      %177 = sbr.rel (%p175) target = $region32
    $region31: #{modality_coder.1} parent=5 // pred_region
      // Predicated region
      $region33: #{modality_coder.1} parent=31 // pred_check
        %p178 = pneg %p31
      $region34: #{modality_coder.1} parent=31 // pred_check_branch
        %180 = sbr.rel (%p178) target = $region36
      $region35: #{modality_coder.1} parent=31 // pred_region
        %s181 = smul.u32 32, %s11
        %p182 = scmp.lt.s32.totalorder %s181, 63
        %s183 = scalar_select %p182, %s181, 63
        %s184 = smul.addr %s183, 2
        %s185 = smul.addr %s184, 4
        %s186 = scalar_lea.vmem %s0, %s185
        %s187 = smul.u32 32, %s11
      $region36: #{modality_coder.1} parent=31 // pred_fallthru
        _
    $region32: #{modality_coder.1} parent=5 // pred_fallthru
      _
    %p188 = scmp.le.s32.totalorder 1, %s11
    %p189 = scmp.lt.s32.totalorder %s11, 3
    %p190 = pnand %p188, %p189
    %p191 = pneg %p190
    // Predicated region
    $region37: #{modality_coder.1} parent=5 // pred_check
      _
    $region38: #{modality_coder.1} parent=5 // pred_check_branch
      %193 = sbr.rel (%p190) target = $region40
    $region39: #{modality_coder.1} parent=5 // pred_region
      %s194 = ssub.s32 %s11, 1
      %s195 = smul.u32 32, %s16
      %p196 = scmp.lt.s32.totalorder %s195, 63
      %s197 = scalar_select %p196, %s195, 63
      %s198 = smul.addr %s197, 2
      %s199 = smul.addr %s198, 4
      %s200 = scalar_lea.vmem %s0, %s199
      %p201 = pneg %p37
      %p202 = pneg %p34
      %p203 = pneg %p58
      %p204 = pneg %p55
      %p205 = pneg %p79
      %p206 = pneg %p76
      %p207 = pneg %p100
      %p208 = pneg %p97
      %p209 = pneg %p121
      %p210 = pneg %p118
      %p211 = pneg %p147
      %p212 = pneg %p144
      %s213 = smul.u32 32, %s16
      %p214 = scmp.lt.s32.totalorder %s213, 63
      %s215 = scalar_select %p214, %s213, 63
      %s216 = smul.addr %s215, 2
      %s217 = smul.addr %s216, 8
      %s218 = scalar_lea.vmem %s5, %s217
      %s219 = smul.u32 32, %s16
      %p220 = scmp.lt.s32.totalorder %s219, 63
      %s221 = scalar_select %p220, %s219, 63
      %s222 = smul.addr %s221, 2
      %s223 = smul.addr %s222, 4
      %s224 = scalar_lea.vmem %s0, %s223
      %s225 = smul.u32 32, %s16
      %s226 = smul.u32 32, %s16
      %p227 = scmp.lt.s32.totalorder %s226, 63
      %s228 = scalar_select %p227, %s226, 63
      %s229 = smul.addr %s228, 2
      %s230 = smul.addr %s229, 8
      %s231 = scalar_lea.vmem %s5, %s230
      %s232 = smul.u32 32, %s16
      %v233 = vld [vmem:[%s224] sm:$0xff]
      %v234 = vld [vmem:[%s224 + $0x8] sm:$0xff]
      %v235 = vld [vmem:[%s224 + $0x10] sm:$0xff]
      %v236 = vld [vmem:[%s224 + $0x18] sm:$0xff]
      %v237 = vld [vmem:[%s224 + $0x20] sm:$0xff]
      %v238 = vld [vmem:[%s224 + $0x28] sm:$0xff]
      %v239 = vld [vmem:[%s224 + $0x30] sm:$0xff]
      %v240 = vld [vmem:[%s224 + $0x38] sm:$0xff]
      %v241 = vld [vmem:[%s224 + $0x40] sm:$0xff]
      %v242 = vld [vmem:[%s224 + $0x48] sm:$0xff]
      %v243 = vld [vmem:[%s224 + $0x50] sm:$0xff]
      %v244 = vld [vmem:[%s224 + $0x58] sm:$0xff]
      %v245 = vld [vmem:[%s224 + $0x60] sm:$0xff]
      %v246 = vld [vmem:[%s224 + $0x68] sm:$0xff]
      %v247 = vld [vmem:[%s224 + $0x70] sm:$0xff]
      %v248 = vld [vmem:[%s224 + $0x78] sm:$0xff]
      %v249 = vld [vmem:[%s224 + $0x80] sm:$0xff]
      %v250 = vld [vmem:[%s224 + $0x88] sm:$0xff]
      %v251 = vld [vmem:[%s224 + $0x90] sm:$0xff]
      %v252 = vld [vmem:[%s224 + $0x98] sm:$0xff]
      %v253 = vld [vmem:[%s224 + $0xa0] sm:$0xff]
      %v254 = vld [vmem:[%s224 + $0xa8] sm:$0xff]
      %v255 = vld [vmem:[%s224 + $0xb0] sm:$0xff]
      %v256 = vld [vmem:[%s224 + $0xb8] sm:$0xff]
      %v257 = vld [vmem:[%s224 + $0xc0] sm:$0xff]
      %v258 = vld [vmem:[%s224 + $0xc8] sm:$0xff]
      %v259 = vld [vmem:[%s224 + $0xd0] sm:$0xff]
      %v260 = vld [vmem:[%s224 + $0xd8] sm:$0xff]
      %v261 = vld [vmem:[%s224 + $0xe0] sm:$0xff]
      %v262 = vld [vmem:[%s224 + $0xe8] sm:$0xff]
      %v263 = vld [vmem:[%s224 + $0xf0] sm:$0xff]
      %v264 = vld [vmem:[%s224 + $0xf8] sm:$0xff]
      %v265 = vld [vmem:[%s1] sm:$0xff]
      %v266 = vld [vmem:[%s1 + $0x8] sm:$0xff]
      %v267 = vld [vmem:[%s1 + $0x10] sm:$0xff]
      %v268 = vld [vmem:[%s1 + $0x18] sm:$0xff]
      %v269 = vld [vmem:[%s1 + $0x20] sm:$0xff]
      %v270 = vld [vmem:[%s1 + $0x28] sm:$0xff]
      %v271 = vld [vmem:[%s1 + $0x30] sm:$0xff]
      %v272 = vld [vmem:[%s1 + $0x38] sm:$0xff]
      %v273 = vld [vmem:[%s1 + $0x40] sm:$0xff]
      %v274 = vld [vmem:[%s1 + $0x48] sm:$0xff]
      %v275 = vld [vmem:[%s1 + $0x50] sm:$0xff]
      %v276 = vld [vmem:[%s1 + $0x58] sm:$0xff]
      %v277 = vld [vmem:[%s1 + $0x60] sm:$0xff]
      %v278 = vld [vmem:[%s1 + $0x68] sm:$0xff]
      %v279 = vld [vmem:[%s1 + $0x70] sm:$0xff]
      %v280 = vld [vmem:[%s1 + $0x78] sm:$0xff]
      %v281 = vld [vmem:[%s1 + $0x80] sm:$0xff]
      %v282 = vld [vmem:[%s1 + $0x88] sm:$0xff]
      %v283 = vld [vmem:[%s1 + $0x90] sm:$0xff]
      %v284 = vld [vmem:[%s1 + $0x98] sm:$0xff]
      %v285 = vld [vmem:[%s1 + $0xa0] sm:$0xff]
      %v286 = vld [vmem:[%s1 + $0xa8] sm:$0xff]
      %v287 = vld [vmem:[%s1 + $0xb0] sm:$0xff]
      %v288 = vld [vmem:[%s1 + $0xb8] sm:$0xff]
      %v289 = vld [vmem:[%s1 + $0xc0] sm:$0xff]
      %v290 = vld [vmem:[%s1 + $0xc8] sm:$0xff]
      %v291 = vld [vmem:[%s1 + $0xd0] sm:$0xff]
      %v292 = vld [vmem:[%s1 + $0xd8] sm:$0xff]
      %v293 = vld [vmem:[%s1 + $0xe0] sm:$0xff]
      %v294 = vld [vmem:[%s1 + $0xe8] sm:$0xff]
      %v295 = vld [vmem:[%s1 + $0xf0] sm:$0xff]
      %v296 = vld [vmem:[%s1 + $0xf8] sm:$0xff]
      %v297 = vld [vmem:[%s2] sm:$0x3]
      %v299 = vlaneseq
      %v300 = vshrl.u32 %v299, 7
      %v301 = vsub.s32 0, %v300
      %v302 = vrot.slane %v297, %v301
      %v303 = vlaneseq
      %v304 = vshrl.u32 %v303, 7
      %v305 = vsub.s32 1, %v304
      %v306 = vrot.slane %v297, %v305
      %v341 = vunpack.c.l.b16 %v233
      %v342 = vunpack.c.h.b16 %v233
      %v343 = vunpack.c.l.b16 %v234
      %v344 = vunpack.c.h.b16 %v234
      %v345 = vunpack.c.l.b16 %v235
      %v346 = vunpack.c.h.b16 %v235
      %v347 = vunpack.c.l.b16 %v236
      %v348 = vunpack.c.h.b16 %v236
      %v349 = vunpack.c.l.b16 %v237
      %v350 = vunpack.c.h.b16 %v237
      %v351 = vunpack.c.l.b16 %v238
      %v352 = vunpack.c.h.b16 %v238
      %v353 = vunpack.c.l.b16 %v239
      %v354 = vunpack.c.h.b16 %v239
      %v355 = vunpack.c.l.b16 %v240
      %v356 = vunpack.c.h.b16 %v240
      %v357 = vunpack.c.l.b16 %v241
      %v358 = vunpack.c.h.b16 %v241
      %v359 = vunpack.c.l.b16 %v242
      %v360 = vunpack.c.h.b16 %v242
      %v361 = vunpack.c.l.b16 %v243
      %v362 = vunpack.c.h.b16 %v243
      %v363 = vunpack.c.l.b16 %v244
      %v364 = vunpack.c.h.b16 %v244
      %v365 = vunpack.c.l.b16 %v245
      %v366 = vunpack.c.h.b16 %v245
      %v367 = vunpack.c.l.b16 %v246
      %v368 = vunpack.c.h.b16 %v246
      %v369 = vunpack.c.l.b16 %v247
      %v370 = vunpack.c.h.b16 %v247
      %v371 = vunpack.c.l.b16 %v248
      %v372 = vunpack.c.h.b16 %v248
      %v373 = vunpack.c.l.b16 %v249
      %v374 = vunpack.c.h.b16 %v249
      %v375 = vunpack.c.l.b16 %v250
      %v376 = vunpack.c.h.b16 %v250
      %v377 = vunpack.c.l.b16 %v251
      %v378 = vunpack.c.h.b16 %v251
      %v379 = vunpack.c.l.b16 %v252
      %v380 = vunpack.c.h.b16 %v252
      %v381 = vunpack.c.l.b16 %v253
      %v382 = vunpack.c.h.b16 %v253
      %v383 = vunpack.c.l.b16 %v254
      %v384 = vunpack.c.h.b16 %v254
      %v385 = vunpack.c.l.b16 %v255
      %v386 = vunpack.c.h.b16 %v255
      %v387 = vunpack.c.l.b16 %v256
      %v388 = vunpack.c.h.b16 %v256
      %v389 = vunpack.c.l.b16 %v257
      %v390 = vunpack.c.h.b16 %v257
      %v391 = vunpack.c.l.b16 %v258
      %v392 = vunpack.c.h.b16 %v258
      %v393 = vunpack.c.l.b16 %v259
      %v394 = vunpack.c.h.b16 %v259
      %v395 = vunpack.c.l.b16 %v260
      %v396 = vunpack.c.h.b16 %v260
      %v397 = vunpack.c.l.b16 %v261
      %v398 = vunpack.c.h.b16 %v261
      %v399 = vunpack.c.l.b16 %v262
      %v400 = vunpack.c.h.b16 %v262
      %v401 = vunpack.c.l.b16 %v263
      %v402 = vunpack.c.h.b16 %v263
      %v403 = vunpack.c.l.b16 %v264
      %v404 = vunpack.c.h.b16 %v264
      %v405 = vpack.c.b16 %v343, %v341
      %v406 = vpack.c.b16 %v344, %v342
      %v407 = vpack.c.b16 %v347, %v345
      %v408 = vpack.c.b16 %v348, %v346
      %v409 = vpack.c.b16 %v351, %v349
      %v410 = vpack.c.b16 %v352, %v350
      %v411 = vpack.c.b16 %v355, %v353
      %v412 = vpack.c.b16 %v356, %v354
      %v413 = vpack.c.b16 %v359, %v357
      %v414 = vpack.c.b16 %v360, %v358
      %v415 = vpack.c.b16 %v363, %v361
      %v416 = vpack.c.b16 %v364, %v362
      %v417 = vpack.c.b16 %v367, %v365
      %v418 = vpack.c.b16 %v368, %v366
      %v419 = vpack.c.b16 %v371, %v369
      %v420 = vpack.c.b16 %v372, %v370
      %v421 = vpack.c.b16 %v375, %v373
      %v422 = vpack.c.b16 %v376, %v374
      %v423 = vpack.c.b16 %v379, %v377
      %v424 = vpack.c.b16 %v380, %v378
      %v425 = vpack.c.b16 %v383, %v381
      %v426 = vpack.c.b16 %v384, %v382
      %v427 = vpack.c.b16 %v387, %v385
      %v428 = vpack.c.b16 %v388, %v386
      %v429 = vpack.c.b16 %v391, %v389
      %v430 = vpack.c.b16 %v392, %v390
      %v431 = vpack.c.b16 %v395, %v393
      %v432 = vpack.c.b16 %v396, %v394
      %v433 = vpack.c.b16 %v399, %v397
      %v434 = vpack.c.b16 %v400, %v398
      %v435 = vpack.c.b16 %v403, %v401
      %v436 = vpack.c.b16 %v404, %v402
      %v501 = vunpack.c.l.b16 %v265
      %v502 = vunpack.c.h.b16 %v265
      %v503 = vunpack.c.l.b16 %v266
      %v504 = vunpack.c.h.b16 %v266
      %v505 = vunpack.c.l.b16 %v267
      %v506 = vunpack.c.h.b16 %v267
      %v507 = vunpack.c.l.b16 %v268
      %v508 = vunpack.c.h.b16 %v268
      %v509 = vunpack.c.l.b16 %v269
      %v510 = vunpack.c.h.b16 %v269
      %v511 = vunpack.c.l.b16 %v270
      %v512 = vunpack.c.h.b16 %v270
      %v513 = vunpack.c.l.b16 %v271
      %v514 = vunpack.c.h.b16 %v271
      %v515 = vunpack.c.l.b16 %v272
      %v516 = vunpack.c.h.b16 %v272
      %v517 = vunpack.c.l.b16 %v273
      %v518 = vunpack.c.h.b16 %v273
      %v519 = vunpack.c.l.b16 %v274
      %v520 = vunpack.c.h.b16 %v274
      %v521 = vunpack.c.l.b16 %v275
      %v522 = vunpack.c.h.b16 %v275
      %v523 = vunpack.c.l.b16 %v276
      %v524 = vunpack.c.h.b16 %v276
      %v525 = vunpack.c.l.b16 %v277
      %v526 = vunpack.c.h.b16 %v277
      %v527 = vunpack.c.l.b16 %v278
      %v528 = vunpack.c.h.b16 %v278
      %v529 = vunpack.c.l.b16 %v279
      %v530 = vunpack.c.h.b16 %v279
      %v531 = vunpack.c.l.b16 %v280
      %v532 = vunpack.c.h.b16 %v280
      %v533 = vunpack.c.l.b16 %v281
      %v534 = vunpack.c.h.b16 %v281
      %v535 = vunpack.c.l.b16 %v282
      %v536 = vunpack.c.h.b16 %v282
      %v537 = vunpack.c.l.b16 %v283
      %v538 = vunpack.c.h.b16 %v283
      %v539 = vunpack.c.l.b16 %v284
      %v540 = vunpack.c.h.b16 %v284
      %v541 = vunpack.c.l.b16 %v285
      %v542 = vunpack.c.h.b16 %v285
      %v543 = vunpack.c.l.b16 %v286
      %v544 = vunpack.c.h.b16 %v286
      %v545 = vunpack.c.l.b16 %v287
      %v546 = vunpack.c.h.b16 %v287
      %v547 = vunpack.c.l.b16 %v288
      %v548 = vunpack.c.h.b16 %v288
      %v549 = vunpack.c.l.b16 %v289
      %v550 = vunpack.c.h.b16 %v289
      %v551 = vunpack.c.l.b16 %v290
      %v552 = vunpack.c.h.b16 %v290
      %v553 = vunpack.c.l.b16 %v291
      %v554 = vunpack.c.h.b16 %v291
      %v555 = vunpack.c.l.b16 %v292
      %v556 = vunpack.c.h.b16 %v292
      %v557 = vunpack.c.l.b16 %v293
      %v558 = vunpack.c.h.b16 %v293
      %v559 = vunpack.c.l.b16 %v294
      %v560 = vunpack.c.h.b16 %v294
      %v561 = vunpack.c.l.b16 %v295
      %v562 = vunpack.c.h.b16 %v295
      %v563 = vunpack.c.l.b16 %v296
      %v564 = vunpack.c.h.b16 %v296
      %v565 = vpack.c.b16 %v503, %v501
      %v566 = vpack.c.b16 %v504, %v502
      %v567 = vpack.c.b16 %v507, %v505
      %v568 = vpack.c.b16 %v508, %v506
      %v569 = vpack.c.b16 %v511, %v509
      %v570 = vpack.c.b16 %v512, %v510
      %v571 = vpack.c.b16 %v515, %v513
      %v572 = vpack.c.b16 %v516, %v514
      %v573 = vpack.c.b16 %v519, %v517
      %v574 = vpack.c.b16 %v520, %v518
      %v575 = vpack.c.b16 %v523, %v521
      %v576 = vpack.c.b16 %v524, %v522
      %v577 = vpack.c.b16 %v527, %v525
      %v578 = vpack.c.b16 %v528, %v526
      %v579 = vpack.c.b16 %v531, %v529
      %v580 = vpack.c.b16 %v532, %v530
      %v581 = vpack.c.b16 %v535, %v533
      %v582 = vpack.c.b16 %v536, %v534
      %v583 = vpack.c.b16 %v539, %v537
      %v584 = vpack.c.b16 %v540, %v538
      %v585 = vpack.c.b16 %v543, %v541
      %v586 = vpack.c.b16 %v544, %v542
      %v587 = vpack.c.b16 %v547, %v545
      %v588 = vpack.c.b16 %v548, %v546
      %v589 = vpack.c.b16 %v551, %v549
      %v590 = vpack.c.b16 %v552, %v550
      %v591 = vpack.c.b16 %v555, %v553
      %v592 = vpack.c.b16 %v556, %v554
      %v593 = vpack.c.b16 %v559, %v557
      %v594 = vpack.c.b16 %v560, %v558
      %v595 = vpack.c.b16 %v563, %v561
      %v596 = vpack.c.b16 %v564, %v562
      %629 = vmatprep.subr.bf16.mxu0 %v566
      %630 = vmatpush1.bf16.msra.mxu0 %v565
      %631 = vmatprep.subr.bf16.mxu0 %v568
      %632 = vmatpush1.bf16.msra.mxu0 %v567
      %633 = vmatprep.subr.bf16.mxu0 %v570
      %634 = vmatpush1.bf16.msra.mxu0 %v569
      %635 = vmatprep.subr.bf16.mxu0 %v572
      %636 = vmatpush1.bf16.msra.mxu0 %v571
      %637 = vmatprep.subr.bf16.mxu0 %v574
      %638 = vmatpush1.bf16.msra.mxu0 %v573
      %639 = vmatprep.subr.bf16.mxu0 %v576
      %640 = vmatpush1.bf16.msra.mxu0 %v575
      %641 = vmatprep.subr.bf16.mxu0 %v578
      %642 = vmatpush1.bf16.msra.mxu0 %v577
      %643 = vmatprep.subr.bf16.mxu0 %v580
      %644 = vmatpush1.bf16.msra.mxu0 %v579
      %645 = vmatprep.subr.bf16.mxu0 %v582
      %646 = vmatpush1.bf16.msra.mxu0 %v581
      %647 = vmatprep.subr.bf16.mxu0 %v584
      %648 = vmatpush1.bf16.msra.mxu0 %v583
      %649 = vmatprep.subr.bf16.mxu0 %v586
      %650 = vmatpush1.bf16.msra.mxu0 %v585
      %651 = vmatprep.subr.bf16.mxu0 %v588
      %652 = vmatpush1.bf16.msra.mxu0 %v587
      %653 = vmatprep.subr.bf16.mxu0 %v590
      %654 = vmatpush1.bf16.msra.mxu0 %v589
      %655 = vmatprep.subr.bf16.mxu0 %v592
      %656 = vmatpush1.bf16.msra.mxu0 %v591
      %657 = vmatprep.subr.bf16.mxu0 %v594
      %658 = vmatpush1.bf16.msra.mxu0 %v593
      %659 = vmatprep.subr.bf16.mxu0 %v596
      %660 = vmatpush1.bf16.msra.mxu0 %v595
      %661 = vmatprep.mubr.bf16.mxu0 %v406
      %662 = vmatmul.mubr.bf16.gmra.mrb[0].mxu0 %v405
      %v663 = vpop.f32.mrb[0].mxu0
      %v664 = vadd.f32 %v302, %v663
      %v665 = vpop.f32.mrb[0].mxu0
      %v666 = vadd.f32 %v306, %v665
      %v667 = vpop.f32.mrb[0].mxu0
      %v668 = vadd.f32 %v302, %v667
      %v669 = vpop.f32.mrb[0].mxu0
      %v670 = vadd.f32 %v306, %v669
      %671 = vmatprep.mubr.bf16.mxu0 %v408
      %672 = vmatmul.mubr.bf16.gmra.mrb[0].mxu0 %v407
      %v673 = vpop.f32.mrb[0].mxu0
      %v674 = vadd.f32 %v302, %v673
      %v675 = vpop.f32.mrb[0].mxu0
      %v676 = vadd.f32 %v306, %v675
      %v677 = vpop.f32.mrb[0].mxu0
      %v678 = vadd.f32 %v302, %v677
      %v679 = vpop.f32.mrb[0].mxu0
      %v680 = vadd.f32 %v306, %v679
      %681 = vmatprep.mubr.bf16.mxu0 %v410
      %682 = vmatmul.mubr.bf16.gmra.mrb[0].mxu0 %v409
      %v683 = vpop.f32.mrb[0].mxu0
      %v684 = vadd.f32 %v302, %v683
      %v685 = vpop.f32.mrb[0].mxu0
      %v686 = vadd.f32 %v306, %v685
      %v687 = vpop.f32.mrb[0].mxu0
      %v688 = vadd.f32 %v302, %v687
      %v689 = vpop.f32.mrb[0].mxu0
      %v690 = vadd.f32 %v306, %v689
      %691 = vmatprep.mubr.bf16.mxu0 %v412
      %692 = vmatmul.mubr.bf16.gmra.mrb[0].mxu0 %v411
      %v693 = vpop.f32.mrb[0].mxu0
      %v694 = vadd.f32 %v302, %v693
      %v695 = vpop.f32.mrb[0].mxu0
      %v696 = vadd.f32 %v306, %v695
      %v697 = vpop.f32.mrb[0].mxu0
      %v698 = vadd.f32 %v302, %v697
      %v699 = vpop.f32.mrb[0].mxu0
      %v700 = vadd.f32 %v306, %v699
      %701 = vmatprep.mubr.bf16.mxu0 %v414
      %702 = vmatmul.mubr.bf16.gmra.mrb[0].mxu0 %v413
      %v703 = vpop.f32.mrb[0].mxu0
      %v704 = vadd.f32 %v302, %v703
      %v705 = vpop.f32.mrb[0].mxu0
      %v706 = vadd.f32 %v306, %v705
      %v707 = vpop.f32.mrb[0].mxu0
      %v708 = vadd.f32 %v302, %v707
      %v709 = vpop.f32.mrb[0].mxu0
      %v710 = vadd.f32 %v306, %v709
      %711 = vmatprep.mubr.bf16.mxu0 %v416
      %712 = vmatmul.mubr.bf16.gmra.mrb[0].mxu0 %v415
      %v713 = vpop.f32.mrb[0].mxu0
      %v714 = vadd.f32 %v302, %v713
      %v715 = vpop.f32.mrb[0].mxu0
      %v716 = vadd.f32 %v306, %v715
      %v717 = vpop.f32.mrb[0].mxu0
      %v718 = vadd.f32 %v302, %v717
      %v719 = vpop.f32.mrb[0].mxu0
      %v720 = vadd.f32 %v306, %v719
      %721 = vmatprep.mubr.bf16.mxu0 %v418
      %722 = vmatmul.mubr.bf16.gmra.mrb[0].mxu0 %v417
      %v723 = vpop.f32.mrb[0].mxu0
      %v724 = vadd.f32 %v302, %v723
      %v725 = vpop.f32.mrb[0].mxu0
      %v726 = vadd.f32 %v306, %v725
      %v727 = vpop.f32.mrb[0].mxu0
      %v728 = vadd.f32 %v302, %v727
      %v729 = vpop.f32.mrb[0].mxu0
      %v730 = vadd.f32 %v306, %v729
      %731 = vmatprep.mubr.bf16.mxu0 %v420
      %732 = vmatmul.mubr.bf16.gmra.mrb[0].mxu0 %v419
      %v733 = vpop.f32.mrb[0].mxu0
      %v734 = vadd.f32 %v302, %v733
      %v735 = vpop.f32.mrb[0].mxu0
      %v736 = vadd.f32 %v306, %v735
      %v737 = vpop.f32.mrb[0].mxu0
      %v738 = vadd.f32 %v302, %v737
      %v739 = vpop.f32.mrb[0].mxu0
      %v740 = vadd.f32 %v306, %v739
      %741 = vmatprep.mubr.bf16.mxu0 %v422
      %742 = vmatmul.mubr.bf16.gmra.mrb[0].mxu0 %v421
      %v743 = vpop.f32.mrb[0].mxu0
      %v744 = vadd.f32 %v302, %v743
      %v745 = vpop.f32.mrb[0].mxu0
      %v746 = vadd.f32 %v306, %v745
      %v747 = vpop.f32.mrb[0].mxu0
      %v748 = vadd.f32 %v302, %v747
      %v749 = vpop.f32.mrb[0].mxu0
      %v750 = vadd.f32 %v306, %v749
      %751 = vmatprep.mubr.bf16.mxu0 %v424
      %752 = vmatmul.mubr.bf16.gmra.mrb[0].mxu0 %v423
      %v753 = vpop.f32.mrb[0].mxu0
      %v754 = vadd.f32 %v302, %v753
      %v755 = vpop.f32.mrb[0].mxu0
      %v756 = vadd.f32 %v306, %v755
      %v757 = vpop.f32.mrb[0].mxu0
      %v758 = vadd.f32 %v302, %v757
      %v759 = vpop.f32.mrb[0].mxu0
      %v760 = vadd.f32 %v306, %v759
      %761 = vmatprep.mubr.bf16.mxu0 %v426
      %762 = vmatmul.mubr.bf16.gmra.mrb[0].mxu0 %v425
      %v763 = vpop.f32.mrb[0].mxu0
      %v764 = vadd.f32 %v302, %v763
      %v765 = vpop.f32.mrb[0].mxu0
      %v766 = vadd.f32 %v306, %v765
      %v767 = vpop.f32.mrb[0].mxu0
      %v768 = vadd.f32 %v302, %v767
      %v769 = vpop.f32.mrb[0].mxu0
      %v770 = vadd.f32 %v306, %v769
      %771 = vmatprep.mubr.bf16.mxu0 %v428
      %772 = vmatmul.mubr.bf16.gmra.mrb[0].mxu0 %v427
      %v773 = vpop.f32.mrb[0].mxu0
      %v774 = vadd.f32 %v302, %v773
      %v775 = vpop.f32.mrb[0].mxu0
      %v776 = vadd.f32 %v306, %v775
      %v777 = vpop.f32.mrb[0].mxu0
      %v778 = vadd.f32 %v302, %v777
      %v779 = vpop.f32.mrb[0].mxu0
      %v780 = vadd.f32 %v306, %v779
      %781 = vmatprep.mubr.bf16.mxu0 %v430
      %782 = vmatmul.mubr.bf16.gmra.mrb[0].mxu0 %v429
      %v783 = vpop.f32.mrb[0].mxu0
      %v784 = vadd.f32 %v302, %v783
      %v785 = vpop.f32.mrb[0].mxu0
      %v786 = vadd.f32 %v306, %v785
      %v787 = vpop.f32.mrb[0].mxu0
      %v788 = vadd.f32 %v302, %v787
      %v789 = vpop.f32.mrb[0].mxu0
      %v790 = vadd.f32 %v306, %v789
      %791 = vmatprep.mubr.bf16.mxu0 %v432
      %792 = vmatmul.mubr.bf16.gmra.mrb[0].mxu0 %v431
      %v793 = vpop.f32.mrb[0].mxu0
      %v794 = vadd.f32 %v302, %v793
      %v795 = vpop.f32.mrb[0].mxu0
      %v796 = vadd.f32 %v306, %v795
      %v797 = vpop.f32.mrb[0].mxu0
      %v798 = vadd.f32 %v302, %v797
      %v799 = vpop.f32.mrb[0].mxu0
      %v800 = vadd.f32 %v306, %v799
      %801 = vmatprep.mubr.bf16.mxu0 %v434
      %802 = vmatmul.mubr.bf16.gmra.mrb[0].mxu0 %v433
      %v803 = vpop.f32.mrb[0].mxu0
      %v804 = vadd.f32 %v302, %v803
      %v805 = vpop.f32.mrb[0].mxu0
      %v806 = vadd.f32 %v306, %v805
      %v807 = vpop.f32.mrb[0].mxu0
      %v808 = vadd.f32 %v302, %v807
      %v809 = vpop.f32.mrb[0].mxu0
      %v810 = vadd.f32 %v306, %v809
      %811 = vmatprep.mubr.bf16.mxu0 %v436
      %812 = vmatmul.mubr.bf16.gmra.mrb[0].mxu0 %v435
      %v813 = vpop.f32.mrb[0].mxu0
      %v814 = vadd.f32 %v302, %v813
      %v815 = vpop.f32.mrb[0].mxu0
      %v816 = vadd.f32 %v306, %v815
      %v817 = vpop.f32.mrb[0].mxu0
      %v818 = vadd.f32 %v302, %v817
      %v819 = vpop.f32.mrb[0].mxu0
      %v820 = vadd.f32 %v306, %v819
      %821 = vdwg.mxu0
      %v822 = vmax.f32 %v664, 0.0
      %v823 = vmax.f32 %v666, 0.0
      %v824 = vmax.f32 %v668, 0.0
      %v825 = vmax.f32 %v670, 0.0
      %v826 = vmax.f32 %v674, 0.0
      %v827 = vmax.f32 %v676, 0.0
      %v828 = vmax.f32 %v678, 0.0
      %v829 = vmax.f32 %v680, 0.0
      %v830 = vmax.f32 %v684, 0.0
      %v831 = vmax.f32 %v686, 0.0
      %v832 = vmax.f32 %v688, 0.0
      %v833 = vmax.f32 %v690, 0.0
      %v834 = vmax.f32 %v694, 0.0
      %v835 = vmax.f32 %v696, 0.0
      %v836 = vmax.f32 %v698, 0.0
      %v837 = vmax.f32 %v700, 0.0
      %v838 = vmax.f32 %v704, 0.0
      %v839 = vmax.f32 %v706, 0.0
      %v840 = vmax.f32 %v708, 0.0
      %v841 = vmax.f32 %v710, 0.0
      %v842 = vmax.f32 %v714, 0.0
      %v843 = vmax.f32 %v716, 0.0
      %v844 = vmax.f32 %v718, 0.0
      %v845 = vmax.f32 %v720, 0.0
      %v846 = vmax.f32 %v724, 0.0
      %v847 = vmax.f32 %v726, 0.0
      %v848 = vmax.f32 %v728, 0.0
      %v849 = vmax.f32 %v730, 0.0
      %v850 = vmax.f32 %v734, 0.0
      %v851 = vmax.f32 %v736, 0.0
      %v852 = vmax.f32 %v738, 0.0
      %v853 = vmax.f32 %v740, 0.0
      %v854 = vmax.f32 %v744, 0.0
      %v855 = vmax.f32 %v746, 0.0
      %v856 = vmax.f32 %v748, 0.0
      %v857 = vmax.f32 %v750, 0.0
      %v858 = vmax.f32 %v754, 0.0
      %v859 = vmax.f32 %v756, 0.0
      %v860 = vmax.f32 %v758, 0.0
      %v861 = vmax.f32 %v760, 0.0
      %v862 = vmax.f32 %v764, 0.0
      %v863 = vmax.f32 %v766, 0.0
      %v864 = vmax.f32 %v768, 0.0
      %v865 = vmax.f32 %v770, 0.0
      %v866 = vmax.f32 %v774, 0.0
      %v867 = vmax.f32 %v776, 0.0
      %v868 = vmax.f32 %v778, 0.0
      %v869 = vmax.f32 %v780, 0.0
      %v870 = vmax.f32 %v784, 0.0
      %v871 = vmax.f32 %v786, 0.0
      %v872 = vmax.f32 %v788, 0.0
      %v873 = vmax.f32 %v790, 0.0
      %v874 = vmax.f32 %v794, 0.0
      %v875 = vmax.f32 %v796, 0.0
      %v876 = vmax.f32 %v798, 0.0
      %v877 = vmax.f32 %v800, 0.0
      %v878 = vmax.f32 %v804, 0.0
      %v879 = vmax.f32 %v806, 0.0
      %v880 = vmax.f32 %v808, 0.0
      %v881 = vmax.f32 %v810, 0.0
      %v882 = vmax.f32 %v814, 0.0
      %v883 = vmax.f32 %v816, 0.0
      %v884 = vmax.f32 %v818, 0.0
      %v885 = vmax.f32 %v820, 0.0
      %v886 = vpack.c.bf16 %v824, %v822
      %v887 = vpack.c.bf16 %v825, %v823
      %v888 = vpack.c.bf16 %v828, %v826
      %v889 = vpack.c.bf16 %v829, %v827
      %v890 = vpack.c.bf16 %v832, %v830
      %v891 = vpack.c.bf16 %v833, %v831
      %v892 = vpack.c.bf16 %v836, %v834
      %v893 = vpack.c.bf16 %v837, %v835
      %v894 = vpack.c.bf16 %v840, %v838
      %v895 = vpack.c.bf16 %v841, %v839
      %v896 = vpack.c.bf16 %v844, %v842
      %v897 = vpack.c.bf16 %v845, %v843
      %v898 = vpack.c.bf16 %v848, %v846
      %v899 = vpack.c.bf16 %v849, %v847
      %v900 = vpack.c.bf16 %v852, %v850
      %v901 = vpack.c.bf16 %v853, %v851
      %v902 = vpack.c.bf16 %v856, %v854
      %v903 = vpack.c.bf16 %v857, %v855
      %v904 = vpack.c.bf16 %v860, %v858
      %v905 = vpack.c.bf16 %v861, %v859
      %v906 = vpack.c.bf16 %v864, %v862
      %v907 = vpack.c.bf16 %v865, %v863
      %v908 = vpack.c.bf16 %v868, %v866
      %v909 = vpack.c.bf16 %v869, %v867
      %v910 = vpack.c.bf16 %v872, %v870
      %v911 = vpack.c.bf16 %v873, %v871
      %v912 = vpack.c.bf16 %v876, %v874
      %v913 = vpack.c.bf16 %v877, %v875
      %v914 = vpack.c.bf16 %v880, %v878
      %v915 = vpack.c.bf16 %v881, %v879
      %v916 = vpack.c.bf16 %v884, %v882
      %v917 = vpack.c.bf16 %v885, %v883
      %v918 = vld [vmem:[%s3] sm:$0xff]
      %v919 = vld [vmem:[%s3 + $0x8] sm:$0xff]
      %v920 = vld [vmem:[%s3 + $0x10] sm:$0xff]
      %v921 = vld [vmem:[%s3 + $0x18] sm:$0xff]
      %v922 = vld [vmem:[%s3 + $0x20] sm:$0xff]
      %v923 = vld [vmem:[%s3 + $0x28] sm:$0xff]
      %v924 = vld [vmem:[%s3 + $0x30] sm:$0xff]
      %v925 = vld [vmem:[%s3 + $0x38] sm:$0xff]
      %v926 = vld [vmem:[%s3 + $0x40] sm:$0xff]
      %v927 = vld [vmem:[%s3 + $0x48] sm:$0xff]
      %v928 = vld [vmem:[%s3 + $0x50] sm:$0xff]
      %v929 = vld [vmem:[%s3 + $0x58] sm:$0xff]
      %v930 = vld [vmem:[%s3 + $0x60] sm:$0xff]
      %v931 = vld [vmem:[%s3 + $0x68] sm:$0xff]
      %v932 = vld [vmem:[%s3 + $0x70] sm:$0xff]
      %v933 = vld [vmem:[%s3 + $0x78] sm:$0xff]
      %v934 = vld [vmem:[%s3 + $0x80] sm:$0xff]
      %v935 = vld [vmem:[%s3 + $0x88] sm:$0xff]
      %v936 = vld [vmem:[%s3 + $0x90] sm:$0xff]
      %v937 = vld [vmem:[%s3 + $0x98] sm:$0xff]
      %v938 = vld [vmem:[%s3 + $0xa0] sm:$0xff]
      %v939 = vld [vmem:[%s3 + $0xa8] sm:$0xff]
      %v940 = vld [vmem:[%s3 + $0xb0] sm:$0xff]
      %v941 = vld [vmem:[%s3 + $0xb8] sm:$0xff]
      %v942 = vld [vmem:[%s3 + $0xc0] sm:$0xff]
      %v943 = vld [vmem:[%s3 + $0xc8] sm:$0xff]
      %v944 = vld [vmem:[%s3 + $0xd0] sm:$0xff]
      %v945 = vld [vmem:[%s3 + $0xd8] sm:$0xff]
      %v946 = vld [vmem:[%s3 + $0xe0] sm:$0xff]
      %v947 = vld [vmem:[%s3 + $0xe8] sm:$0xff]
      %v948 = vld [vmem:[%s3 + $0xf0] sm:$0xff]
      %v949 = vld [vmem:[%s3 + $0xf8] sm:$0xff]
      %v950 = vld [vmem:[%s4] sm:$0x3]
      %v952 = vlaneseq
      %v953 = vshrl.u32 %v952, 7
      %v954 = vsub.s32 0, %v953
      %v955 = vrot.slane %v950, %v954
      %v956 = vlaneseq
      %v957 = vshrl.u32 %v956, 7
      %v958 = vsub.s32 1, %v957
      %v959 = vrot.slane %v950, %v958
      %v994 = vunpack.c.l.b16 %v918
      %v995 = vunpack.c.h.b16 %v918
      %v996 = vunpack.c.l.b16 %v919
      %v997 = vunpack.c.h.b16 %v919
      %v998 = vunpack.c.l.b16 %v920
      %v999 = vunpack.c.h.b16 %v920
      %v1000 = vunpack.c.l.b16 %v921
      %v1001 = vunpack.c.h.b16 %v921
      %v1002 = vunpack.c.l.b16 %v922
      %v1003 = vunpack.c.h.b16 %v922
      %v1004 = vunpack.c.l.b16 %v923
      %v1005 = vunpack.c.h.b16 %v923
      %v1006 = vunpack.c.l.b16 %v924
      %v1007 = vunpack.c.h.b16 %v924
      %v1008 = vunpack.c.l.b16 %v925
      %v1009 = vunpack.c.h.b16 %v925
      %v1010 = vunpack.c.l.b16 %v926
      %v1011 = vunpack.c.h.b16 %v926
      %v1012 = vunpack.c.l.b16 %v927
      %v1013 = vunpack.c.h.b16 %v927
      %v1014 = vunpack.c.l.b16 %v928
      %v1015 = vunpack.c.h.b16 %v928
      %v1016 = vunpack.c.l.b16 %v929
      %v1017 = vunpack.c.h.b16 %v929
      %v1018 = vunpack.c.l.b16 %v930
      %v1019 = vunpack.c.h.b16 %v930
      %v1020 = vunpack.c.l.b16 %v931
      %v1021 = vunpack.c.h.b16 %v931
      %v1022 = vunpack.c.l.b16 %v932
      %v1023 = vunpack.c.h.b16 %v932
      %v1024 = vunpack.c.l.b16 %v933
      %v1025 = vunpack.c.h.b16 %v933
      %v1026 = vunpack.c.l.b16 %v934
      %v1027 = vunpack.c.h.b16 %v934
      %v1028 = vunpack.c.l.b16 %v935
      %v1029 = vunpack.c.h.b16 %v935
      %v1030 = vunpack.c.l.b16 %v936
      %v1031 = vunpack.c.h.b16 %v936
      %v1032 = vunpack.c.l.b16 %v937
      %v1033 = vunpack.c.h.b16 %v937
      %v1034 = vunpack.c.l.b16 %v938
      %v1035 = vunpack.c.h.b16 %v938
      %v1036 = vunpack.c.l.b16 %v939
      %v1037 = vunpack.c.h.b16 %v939
      %v1038 = vunpack.c.l.b16 %v940
      %v1039 = vunpack.c.h.b16 %v940
      %v1040 = vunpack.c.l.b16 %v941
      %v1041 = vunpack.c.h.b16 %v941
      %v1042 = vunpack.c.l.b16 %v942
      %v1043 = vunpack.c.h.b16 %v942
      %v1044 = vunpack.c.l.b16 %v943
      %v1045 = vunpack.c.h.b16 %v943
      %v1046 = vunpack.c.l.b16 %v944
      %v1047 = vunpack.c.h.b16 %v944
      %v1048 = vunpack.c.l.b16 %v945
      %v1049 = vunpack.c.h.b16 %v945
      %v1050 = vunpack.c.l.b16 %v946
      %v1051 = vunpack.c.h.b16 %v946
      %v1052 = vunpack.c.l.b16 %v947
      %v1053 = vunpack.c.h.b16 %v947
      %v1054 = vunpack.c.l.b16 %v948
      %v1055 = vunpack.c.h.b16 %v948
      %v1056 = vunpack.c.l.b16 %v949
      %v1057 = vunpack.c.h.b16 %v949
      %v1058 = vpack.c.b16 %v996, %v994
      %v1059 = vpack.c.b16 %v997, %v995
      %v1060 = vpack.c.b16 %v1000, %v998
      %v1061 = vpack.c.b16 %v1001, %v999
      %v1062 = vpack.c.b16 %v1004, %v1002
      %v1063 = vpack.c.b16 %v1005, %v1003
      %v1064 = vpack.c.b16 %v1008, %v1006
      %v1065 = vpack.c.b16 %v1009, %v1007
      %v1066 = vpack.c.b16 %v1012, %v1010
      %v1067 = vpack.c.b16 %v1013, %v1011
      %v1068 = vpack.c.b16 %v1016, %v1014
      %v1069 = vpack.c.b16 %v1017, %v1015
      %v1070 = vpack.c.b16 %v1020, %v1018
      %v1071 = vpack.c.b16 %v1021, %v1019
      %v1072 = vpack.c.b16 %v1024, %v1022
      %v1073 = vpack.c.b16 %v1025, %v1023
      %v1074 = vpack.c.b16 %v1028, %v1026
      %v1075 = vpack.c.b16 %v1029, %v1027
      %v1076 = vpack.c.b16 %v1032, %v1030
      %v1077 = vpack.c.b16 %v1033, %v1031
      %v1078 = vpack.c.b16 %v1036, %v1034
      %v1079 = vpack.c.b16 %v1037, %v1035
      %v1080 = vpack.c.b16 %v1040, %v1038
      %v1081 = vpack.c.b16 %v1041, %v1039
      %v1082 = vpack.c.b16 %v1044, %v1042
      %v1083 = vpack.c.b16 %v1045, %v1043
      %v1084 = vpack.c.b16 %v1048, %v1046
      %v1085 = vpack.c.b16 %v1049, %v1047
      %v1086 = vpack.c.b16 %v1052, %v1050
      %v1087 = vpack.c.b16 %v1053, %v1051
      %v1088 = vpack.c.b16 %v1056, %v1054
      %v1089 = vpack.c.b16 %v1057, %v1055
      %1122 = vmatprep.subr.bf16.mxu0 %v1059
      %1123 = vmatpush1.bf16.msra.mxu0 %v1058
      %1124 = vmatprep.subr.bf16.mxu0 %v1061
      %1125 = vmatpush1.bf16.msra.mxu0 %v1060
      %1126 = vmatprep.subr.bf16.mxu0 %v1063
      %1127 = vmatpush1.bf16.msra.mxu0 %v1062
      %1128 = vmatprep.subr.bf16.mxu0 %v1065
      %1129 = vmatpush1.bf16.msra.mxu0 %v1064
      %1130 = vmatprep.subr.bf16.mxu0 %v1067
      %1131 = vmatpush1.bf16.msra.mxu0 %v1066
      %1132 = vmatprep.subr.bf16.mxu0 %v1069
      %1133 = vmatpush1.bf16.msra.mxu0 %v1068
      %1134 = vmatprep.subr.bf16.mxu0 %v1071
      %1135 = vmatpush1.bf16.msra.mxu0 %v1070
      %1136 = vmatprep.subr.bf16.mxu0 %v1073
      %1137 = vmatpush1.bf16.msra.mxu0 %v1072
      %1138 = vmatprep.subr.bf16.mxu0 %v1075
      %1139 = vmatpush1.bf16.msra.mxu0 %v1074
      %1140 = vmatprep.subr.bf16.mxu0 %v1077
      %1141 = vmatpush1.bf16.msra.mxu0 %v1076
      %1142 = vmatprep.subr.bf16.mxu0 %v1079
      %1143 = vmatpush1.bf16.msra.mxu0 %v1078
      %1144 = vmatprep.subr.bf16.mxu0 %v1081
      %1145 = vmatpush1.bf16.msra.mxu0 %v1080
      %1146 = vmatprep.subr.bf16.mxu0 %v1083
      %1147 = vmatpush1.bf16.msra.mxu0 %v1082
      %1148 = vmatprep.subr.bf16.mxu0 %v1085
      %1149 = vmatpush1.bf16.msra.mxu0 %v1084
      %1150 = vmatprep.subr.bf16.mxu0 %v1087
      %1151 = vmatpush1.bf16.msra.mxu0 %v1086
      %1152 = vmatprep.subr.bf16.mxu0 %v1089
      %1153 = vmatpush1.bf16.msra.mxu0 %v1088
      %1154 = vmatprep.mubr.bf16.mxu0 %v887
      %1155 = vmatmul.mubr.bf16.gmra.mrb[0].mxu0 %v886
      %v1156 = vpop.f32.mrb[0].mxu0
      %v1157 = vadd.f32 %v955, %v1156
      %v1158 = vpop.f32.mrb[0].mxu0
      %v1159 = vadd.f32 %v959, %v1158
      %v1160 = vpop.f32.mrb[0].mxu0
      %v1161 = vadd.f32 %v955, %v1160
      %v1162 = vpop.f32.mrb[0].mxu0
      %v1163 = vadd.f32 %v959, %v1162
      %1164 = vmatprep.mubr.bf16.mxu0 %v889
      %1165 = vmatmul.mubr.bf16.gmra.mrb[0].mxu0 %v888
      %v1166 = vpop.f32.mrb[0].mxu0
      %v1167 = vadd.f32 %v955, %v1166
      %v1168 = vpop.f32.mrb[0].mxu0
      %v1169 = vadd.f32 %v959, %v1168
      %v1170 = vpop.f32.mrb[0].mxu0
      %v1171 = vadd.f32 %v955, %v1170
      %v1172 = vpop.f32.mrb[0].mxu0
      %v1173 = vadd.f32 %v959, %v1172
      %1174 = vmatprep.mubr.bf16.mxu0 %v891
      %1175 = vmatmul.mubr.bf16.gmra.mrb[0].mxu0 %v890
      %v1176 = vpop.f32.mrb[0].mxu0
      %v1177 = vadd.f32 %v955, %v1176
      %v1178 = vpop.f32.mrb[0].mxu0
      %v1179 = vadd.f32 %v959, %v1178
      %v1180 = vpop.f32.mrb[0].mxu0
      %v1181 = vadd.f32 %v955, %v1180
      %v1182 = vpop.f32.mrb[0].mxu0
      %v1183 = vadd.f32 %v959, %v1182
      %1184 = vmatprep.mubr.bf16.mxu0 %v893
      %1185 = vmatmul.mubr.bf16.gmra.mrb[0].mxu0 %v892
      %v1186 = vpop.f32.mrb[0].mxu0
      %v1187 = vadd.f32 %v955, %v1186
      %v1188 = vpop.f32.mrb[0].mxu0
      %v1189 = vadd.f32 %v959, %v1188
      %v1190 = vpop.f32.mrb[0].mxu0
      %v1191 = vadd.f32 %v955, %v1190
      %v1192 = vpop.f32.mrb[0].mxu0
      %v1193 = vadd.f32 %v959, %v1192
      %1194 = vmatprep.mubr.bf16.mxu0 %v895
      %1195 = vmatmul.mubr.bf16.gmra.mrb[0].mxu0 %v894
      %v1196 = vpop.f32.mrb[0].mxu0
      %v1197 = vadd.f32 %v955, %v1196
      %v1198 = vpop.f32.mrb[0].mxu0
      %v1199 = vadd.f32 %v959, %v1198
      %v1200 = vpop.f32.mrb[0].mxu0
      %v1201 = vadd.f32 %v955, %v1200
      %v1202 = vpop.f32.mrb[0].mxu0
      %v1203 = vadd.f32 %v959, %v1202
      %1204 = vmatprep.mubr.bf16.mxu0 %v897
      %1205 = vmatmul.mubr.bf16.gmra.mrb[0].mxu0 %v896
      %v1206 = vpop.f32.mrb[0].mxu0
      %v1207 = vadd.f32 %v955, %v1206
      %v1208 = vpop.f32.mrb[0].mxu0
      %v1209 = vadd.f32 %v959, %v1208
      %v1210 = vpop.f32.mrb[0].mxu0
      %v1211 = vadd.f32 %v955, %v1210
      %v1212 = vpop.f32.mrb[0].mxu0
      %v1213 = vadd.f32 %v959, %v1212
      %1214 = vmatprep.mubr.bf16.mxu0 %v899
      %1215 = vmatmul.mubr.bf16.gmra.mrb[0].mxu0 %v898
      %v1216 = vpop.f32.mrb[0].mxu0
      %v1217 = vadd.f32 %v955, %v1216
      %v1218 = vpop.f32.mrb[0].mxu0
      %v1219 = vadd.f32 %v959, %v1218
      %v1220 = vpop.f32.mrb[0].mxu0
      %v1221 = vadd.f32 %v955, %v1220
      %v1222 = vpop.f32.mrb[0].mxu0
      %v1223 = vadd.f32 %v959, %v1222
      %1224 = vmatprep.mubr.bf16.mxu0 %v901
      %1225 = vmatmul.mubr.bf16.gmra.mrb[0].mxu0 %v900
      %v1226 = vpop.f32.mrb[0].mxu0
      %v1227 = vadd.f32 %v955, %v1226
      %v1228 = vpop.f32.mrb[0].mxu0
      %v1229 = vadd.f32 %v959, %v1228
      %v1230 = vpop.f32.mrb[0].mxu0
      %v1231 = vadd.f32 %v955, %v1230
      %v1232 = vpop.f32.mrb[0].mxu0
      %v1233 = vadd.f32 %v959, %v1232
      %1234 = vmatprep.mubr.bf16.mxu0 %v903
      %1235 = vmatmul.mubr.bf16.gmra.mrb[0].mxu0 %v902
      %v1236 = vpop.f32.mrb[0].mxu0
      %v1237 = vadd.f32 %v955, %v1236
      %v1238 = vpop.f32.mrb[0].mxu0
      %v1239 = vadd.f32 %v959, %v1238
      %v1240 = vpop.f32.mrb[0].mxu0
      %v1241 = vadd.f32 %v955, %v1240
      %v1242 = vpop.f32.mrb[0].mxu0
      %v1243 = vadd.f32 %v959, %v1242
      %1244 = vmatprep.mubr.bf16.mxu0 %v905
      %1245 = vmatmul.mubr.bf16.gmra.mrb[0].mxu0 %v904
      %v1246 = vpop.f32.mrb[0].mxu0
      %v1247 = vadd.f32 %v955, %v1246
      %v1248 = vpop.f32.mrb[0].mxu0
      %v1249 = vadd.f32 %v959, %v1248
      %v1250 = vpop.f32.mrb[0].mxu0
      %v1251 = vadd.f32 %v955, %v1250
      %v1252 = vpop.f32.mrb[0].mxu0
      %v1253 = vadd.f32 %v959, %v1252
      %1254 = vmatprep.mubr.bf16.mxu0 %v907
      %1255 = vmatmul.mubr.bf16.gmra.mrb[0].mxu0 %v906
      %v1256 = vpop.f32.mrb[0].mxu0
      %v1257 = vadd.f32 %v955, %v1256
      %v1258 = vpop.f32.mrb[0].mxu0
      %v1259 = vadd.f32 %v959, %v1258
      %v1260 = vpop.f32.mrb[0].mxu0
      %v1261 = vadd.f32 %v955, %v1260
      %v1262 = vpop.f32.mrb[0].mxu0
      %v1263 = vadd.f32 %v959, %v1262
      %1264 = vmatprep.mubr.bf16.mxu0 %v909
      %1265 = vmatmul.mubr.bf16.gmra.mrb[0].mxu0 %v908
      %v1266 = vpop.f32.mrb[0].mxu0
      %v1267 = vadd.f32 %v955, %v1266
      %v1268 = vpop.f32.mrb[0].mxu0
      %v1269 = vadd.f32 %v959, %v1268
      %v1270 = vpop.f32.mrb[0].mxu0
      %v1271 = vadd.f32 %v955, %v1270
      %v1272 = vpop.f32.mrb[0].mxu0
      %v1273 = vadd.f32 %v959, %v1272
      %1274 = vmatprep.mubr.bf16.mxu0 %v911
      %1275 = vmatmul.mubr.bf16.gmra.mrb[0].mxu0 %v910
      %v1276 = vpop.f32.mrb[0].mxu0
      %v1277 = vadd.f32 %v955, %v1276
      %v1278 = vpop.f32.mrb[0].mxu0
      %v1279 = vadd.f32 %v959, %v1278
      %v1280 = vpop.f32.mrb[0].mxu0
      %v1281 = vadd.f32 %v955, %v1280
      %v1282 = vpop.f32.mrb[0].mxu0
      %v1283 = vadd.f32 %v959, %v1282
      %1284 = vmatprep.mubr.bf16.mxu0 %v913
      %1285 = vmatmul.mubr.bf16.gmra.mrb[0].mxu0 %v912
      %v1286 = vpop.f32.mrb[0].mxu0
      %v1287 = vadd.f32 %v955, %v1286
      %v1288 = vpop.f32.mrb[0].mxu0
      %v1289 = vadd.f32 %v959, %v1288
      %v1290 = vpop.f32.mrb[0].mxu0
      %v1291 = vadd.f32 %v955, %v1290
      %v1292 = vpop.f32.mrb[0].mxu0
      %v1293 = vadd.f32 %v959, %v1292
      %1294 = vmatprep.mubr.bf16.mxu0 %v915
      %1295 = vmatmul.mubr.bf16.gmra.mrb[0].mxu0 %v914
      %v1296 = vpop.f32.mrb[0].mxu0
      %v1297 = vadd.f32 %v955, %v1296
      %v1298 = vpop.f32.mrb[0].mxu0
      %v1299 = vadd.f32 %v959, %v1298
      %v1300 = vpop.f32.mrb[0].mxu0
      %v1301 = vadd.f32 %v955, %v1300
      %v1302 = vpop.f32.mrb[0].mxu0
      %v1303 = vadd.f32 %v959, %v1302
      %1304 = vmatprep.mubr.bf16.mxu0 %v917
      %1305 = vmatmul.mubr.bf16.gmra.mrb[0].mxu0 %v916
      %v1306 = vpop.f32.mrb[0].mxu0
      %v1307 = vadd.f32 %v955, %v1306
      %v1308 = vpop.f32.mrb[0].mxu0
      %v1309 = vadd.f32 %v959, %v1308
      %v1310 = vpop.f32.mrb[0].mxu0
      %v1311 = vadd.f32 %v955, %v1310
      %v1312 = vpop.f32.mrb[0].mxu0
      %v1313 = vadd.f32 %v959, %v1312
      %1314 = vdwg.mxu0
      %v1315 = vmax.f32 %v1157, 0.0
      %v1316 = vmax.f32 %v1159, 0.0
      %v1317 = vmax.f32 %v1161, 0.0
      %v1318 = vmax.f32 %v1163, 0.0
      %v1319 = vmax.f32 %v1167, 0.0
      %v1320 = vmax.f32 %v1169, 0.0
      %v1321 = vmax.f32 %v1171, 0.0
      %v1322 = vmax.f32 %v1173, 0.0
      %v1323 = vmax.f32 %v1177, 0.0
      %v1324 = vmax.f32 %v1179, 0.0
      %v1325 = vmax.f32 %v1181, 0.0
      %v1326 = vmax.f32 %v1183, 0.0
      %v1327 = vmax.f32 %v1187, 0.0
      %v1328 = vmax.f32 %v1189, 0.0
      %v1329 = vmax.f32 %v1191, 0.0
      %v1330 = vmax.f32 %v1193, 0.0
      %v1331 = vmax.f32 %v1197, 0.0
      %v1332 = vmax.f32 %v1199, 0.0
      %v1333 = vmax.f32 %v1201, 0.0
      %v1334 = vmax.f32 %v1203, 0.0
      %v1335 = vmax.f32 %v1207, 0.0
      %v1336 = vmax.f32 %v1209, 0.0
      %v1337 = vmax.f32 %v1211, 0.0
      %v1338 = vmax.f32 %v1213, 0.0
      %v1339 = vmax.f32 %v1217, 0.0
      %v1340 = vmax.f32 %v1219, 0.0
      %v1341 = vmax.f32 %v1221, 0.0
      %v1342 = vmax.f32 %v1223, 0.0
      %v1343 = vmax.f32 %v1227, 0.0
      %v1344 = vmax.f32 %v1229, 0.0
      %v1345 = vmax.f32 %v1231, 0.0
      %v1346 = vmax.f32 %v1233, 0.0
      %v1347 = vmax.f32 %v1237, 0.0
      %v1348 = vmax.f32 %v1239, 0.0
      %v1349 = vmax.f32 %v1241, 0.0
      %v1350 = vmax.f32 %v1243, 0.0
      %v1351 = vmax.f32 %v1247, 0.0
      %v1352 = vmax.f32 %v1249, 0.0
      %v1353 = vmax.f32 %v1251, 0.0
      %v1354 = vmax.f32 %v1253, 0.0
      %v1355 = vmax.f32 %v1257, 0.0
      %v1356 = vmax.f32 %v1259, 0.0
      %v1357 = vmax.f32 %v1261, 0.0
      %v1358 = vmax.f32 %v1263, 0.0
      %v1359 = vmax.f32 %v1267, 0.0
      %v1360 = vmax.f32 %v1269, 0.0
      %v1361 = vmax.f32 %v1271, 0.0
      %v1362 = vmax.f32 %v1273, 0.0
      %v1363 = vmax.f32 %v1277, 0.0
      %v1364 = vmax.f32 %v1279, 0.0
      %v1365 = vmax.f32 %v1281, 0.0
      %v1366 = vmax.f32 %v1283, 0.0
      %v1367 = vmax.f32 %v1287, 0.0
      %v1368 = vmax.f32 %v1289, 0.0
      %v1369 = vmax.f32 %v1291, 0.0
      %v1370 = vmax.f32 %v1293, 0.0
      %v1371 = vmax.f32 %v1297, 0.0
      %v1372 = vmax.f32 %v1299, 0.0
      %v1373 = vmax.f32 %v1301, 0.0
      %v1374 = vmax.f32 %v1303, 0.0
      %v1375 = vmax.f32 %v1307, 0.0
      %v1376 = vmax.f32 %v1309, 0.0
      %v1377 = vmax.f32 %v1311, 0.0
      %v1378 = vmax.f32 %v1313, 0.0
      %1379 = vst [vmem:[%s231] sm:$0xff] %v1315
      %1380 = vst [vmem:[%s231 + $0x8] sm:$0xff] %v1316
      %1381 = vst [vmem:[%s231 + $0x10] sm:$0xff] %v1317
      %1382 = vst [vmem:[%s231 + $0x18] sm:$0xff] %v1318
      %1383 = vst [vmem:[%s231 + $0x20] sm:$0xff] %v1319
      %1384 = vst [vmem:[%s231 + $0x28] sm:$0xff] %v1320
      %1385 = vst [vmem:[%s231 + $0x30] sm:$0xff] %v1321
      %1386 = vst [vmem:[%s231 + $0x38] sm:$0xff] %v1322
      %1387 = vst [vmem:[%s231 + $0x40] sm:$0xff] %v1323
      %1388 = vst [vmem:[%s231 + $0x48] sm:$0xff] %v1324
      %1389 = vst [vmem:[%s231 + $0x50] sm:$0xff] %v1325
      %1390 = vst [vmem:[%s231 + $0x58] sm:$0xff] %v1326
      %1391 = vst [vmem:[%s231 + $0x60] sm:$0xff] %v1327
      %1392 = vst [vmem:[%s231 + $0x68] sm:$0xff] %v1328
      %1393 = vst [vmem:[%s231 + $0x70] sm:$0xff] %v1329
      %1394 = vst [vmem:[%s231 + $0x78] sm:$0xff] %v1330
      %1395 = vst [vmem:[%s231 + $0x80] sm:$0xff] %v1331
      %1396 = vst [vmem:[%s231 + $0x88] sm:$0xff] %v1332
      %1397 = vst [vmem:[%s231 + $0x90] sm:$0xff] %v1333
      %1398 = vst [vmem:[%s231 + $0x98] sm:$0xff] %v1334
      %1399 = vst [vmem:[%s231 + $0xa0] sm:$0xff] %v1335
      %1400 = vst [vmem:[%s231 + $0xa8] sm:$0xff] %v1336
      %1401 = vst [vmem:[%s231 + $0xb0] sm:$0xff] %v1337
      %1402 = vst [vmem:[%s231 + $0xb8] sm:$0xff] %v1338
      %1403 = vst [vmem:[%s231 + $0xc0] sm:$0xff] %v1339
      %1404 = vst [vmem:[%s231 + $0xc8] sm:$0xff] %v1340
      %1405 = vst [vmem:[%s231 + $0xd0] sm:$0xff] %v1341
      %1406 = vst [vmem:[%s231 + $0xd8] sm:$0xff] %v1342
      %1407 = vst [vmem:[%s231 + $0xe0] sm:$0xff] %v1343
      %1408 = vst [vmem:[%s231 + $0xe8] sm:$0xff] %v1344
      %1409 = vst [vmem:[%s231 + $0xf0] sm:$0xff] %v1345
      %1410 = vst [vmem:[%s231 + $0xf8] sm:$0xff] %v1346
      %1411 = vst [vmem:[%s231 + $0x100] sm:$0xff] %v1347
      %1412 = vst [vmem:[%s231 + $0x108] sm:$0xff] %v1348
      %1413 = vst [vmem:[%s231 + $0x110] sm:$0xff] %v1349
      %1414 = vst [vmem:[%s231 + $0x118] sm:$0xff] %v1350
      %1415 = vst [vmem:[%s231 + $0x120] sm:$0xff] %v1351
      %1416 = vst [vmem:[%s231 + $0x128] sm:$0xff] %v1352
      %1417 = vst [vmem:[%s231 + $0x130] sm:$0xff] %v1353
      %1418 = vst [vmem:[%s231 + $0x138] sm:$0xff] %v1354
      %1419 = vst [vmem:[%s231 + $0x140] sm:$0xff] %v1355
      %1420 = vst [vmem:[%s231 + $0x148] sm:$0xff] %v1356
      %1421 = vst [vmem:[%s231 + $0x150] sm:$0xff] %v1357
      %1422 = vst [vmem:[%s231 + $0x158] sm:$0xff] %v1358
      %1423 = vst [vmem:[%s231 + $0x160] sm:$0xff] %v1359
      %1424 = vst [vmem:[%s231 + $0x168] sm:$0xff] %v1360
      %1425 = vst [vmem:[%s231 + $0x170] sm:$0xff] %v1361
      %1426 = vst [vmem:[%s231 + $0x178] sm:$0xff] %v1362
      %1427 = vst [vmem:[%s231 + $0x180] sm:$0xff] %v1363
      %1428 = vst [vmem:[%s231 + $0x188] sm:$0xff] %v1364
      %1429 = vst [vmem:[%s231 + $0x190] sm:$0xff] %v1365
      %1430 = vst [vmem:[%s231 + $0x198] sm:$0xff] %v1366
      %1431 = vst [vmem:[%s231 + $0x1a0] sm:$0xff] %v1367
      %1432 = vst [vmem:[%s231 + $0x1a8] sm:$0xff] %v1368
      %1433 = vst [vmem:[%s231 + $0x1b0] sm:$0xff] %v1369
      %1434 = vst [vmem:[%s231 + $0x1b8] sm:$0xff] %v1370
      %1435 = vst [vmem:[%s231 + $0x1c0] sm:$0xff] %v1371
      %1436 = vst [vmem:[%s231 + $0x1c8] sm:$0xff] %v1372
      %1437 = vst [vmem:[%s231 + $0x1d0] sm:$0xff] %v1373
      %1438 = vst [vmem:[%s231 + $0x1d8] sm:$0xff] %v1374
      %1439 = vst [vmem:[%s231 + $0x1e0] sm:$0xff] %v1375
      %1440 = vst [vmem:[%s231 + $0x1e8] sm:$0xff] %v1376
      %1441 = vst [vmem:[%s231 + $0x1f0] sm:$0xff] %v1377
      %1442 = vst [vmem:[%s231 + $0x1f8] sm:$0xff] %v1378
      %s1443 = smul.u32 32, %s16
      %p1444 = scmp.lt.s32.totalorder %s1443, 63
      %s1445 = scalar_select %p1444, %s1443, 63
      %s1446 = smul.addr %s1445, 2
      %s1447 = smul.addr %s1446, 8
      %s1448 = scalar_lea.vmem %s5, %s1447
      // Predicated region
      $region41: #{modality_coder.1} parent=39 // pred_check
        %p1449 = pneg %p144
      $region42: #{modality_coder.1} parent=39 // pred_check_branch
        %1451 = sbr.rel (%p1449) target = $region44
      $region43: #{modality_coder.1} parent=39 // pred_region
        %s1452 = smul.u32 32, %s16
      $region44: #{modality_coder.1} parent=39 // pred_fallthru
        _
    $region40: #{modality_coder.1} parent=5 // pred_fallthru
      _
    %p1453 = scmp.le.s32.totalorder 2, %s11
    // Predicated region
    $region45: #{modality_coder.1} parent=5 // pred_check
      %p1454 = pneg %p1453
    $region46: #{modality_coder.1} parent=5 // pred_check_branch
      %1456 = sbr.rel (%p1454) target = $region48
    $region47: #{modality_coder.1} parent=5 // pred_region
      %s1457 = ssub.s32 %s11, 2
      // Predicated region
      $region49: #{modality_coder.1} parent=47 // pred_check
        %p1458 = pneg %p150
      $region50: #{modality_coder.1} parent=47 // pred_check_branch
        %1460 = sbr.rel (%p1458) target = $region52
      $region51: #{modality_coder.1} parent=47 // pred_region
        %s1461 = smul.u32 32, %s17
        %p1462 = scmp.lt.s32.totalorder %s1461, 63
        %s1463 = scalar_select %p1462, %s1461, 63
        %s1464 = smul.addr %s1463, 2
        %s1465 = smul.addr %s1464, 8
        %s1466 = scalar_lea.vmem %s5, %s1465
      $region52: #{modality_coder.1} parent=47 // pred_fallthru
        _
    $region48: #{modality_coder.1} parent=5 // pred_fallthru
      _
  $region6: #{modality_coder.1} parent=0 // loop_footer
    %s15 = sadd.s32 1, %s11
  $region7: #{modality_coder.1} parent=0 // loop_footer_branch
    %10 = sbr.rel target = $region3
  $region8: #{modality_coder.1} parent=0 // loop_exit
    _

</llo_original>
